<compile_context>
chip_gen: v7x
topology: tpu7x:2x2x1
jax: 0.10.0
libtpu: 0.0.40
codegen_flags: <defaults>
</compile_context>

<pallas_src>
import numpy as np
import jax
import jax.numpy as jnp
from jax.experimental import pallas as pl
from jax.experimental.pallas import tpu as pltpu

_GRAY_R, _GRAY_G, _GRAY_B = 0.2989, 0.587, 0.114  # torchvision rgb_to_grayscale


def _round_up(x, m):
    return ((x + m - 1) // m) * m


def _interp_kernel(params_ref, x_s_ref, x_t_ref, m_ref, out_ref):
    # params (SMEM f32[5]): [contrast c, contrast offset (1-c)*mean_gray,
    #                        saturation s, brightness b, lam]
    c = params_ref[0]
    coff = params_ref[1]
    s = params_ref[2]
    b = params_ref[3]
    lam = params_ref[4]

    w = lam * m_ref[...]                       # (TILE_H, W) blend weight

    # adjust_contrast: clip(c*x + (1-c)*mean_gray)  -- per channel slab
    t1_r = jnp.clip(c * x_t_ref[0] + coff, 0.0, 1.0)
    t1_g = jnp.clip(c * x_t_ref[1] + coff, 0.0, 1.0)
    t1_b = jnp.clip(c * x_t_ref[2] + coff, 0.0, 1.0)

    # adjust_saturation: blend with per-pixel grayscale
    gray1 = _GRAY_R * t1_r + _GRAY_G * t1_g + _GRAY_B * t1_b
    sat_off = (1.0 - s) * gray1

    for ch, t1 in ((0, t1_r), (1, t1_g), (2, t1_b)):
        t2 = jnp.clip(s * t1 + sat_off, 0.0, 1.0)
        t3 = jnp.clip(b * t2, 0.0, 1.0)        # adjust_brightness
        x_s_ch = x_s_ref[ch]
        # mask*(lam*t3 + (1-lam)*x_s) + (1-mask)*x_s == lam*mask*(t3-x_s) + x_s
        out_ref[ch] = w * (t3 - x_s_ch) + x_s_ch


def _choose_tile_h(H, W, active_rows, budget_bytes):
    """Pick a row-tile height: multiple of 8 (or full H), bounded by a
    double-buffered VMEM budget, aiming for >= 2 grid steps when possible."""
    # 10 f32 slabs per grid step (3 x_s + 3 x_t + 1 mask in, 3 out), x2 buffers.
    bytes_per_row = 10 * 2 * W * 4
    tile_h = max(8, (budget_bytes // bytes_per_row) // 8 * 8)
    if active_rows > 8:
        # keep at least 2 grid steps so v7x can shard across both TensorCores
        half = _round_up(-(-active_rows // 2), 8)
        tile_h = min(tile_h, half)
    tile_h = min(tile_h, _round_up(active_rows, 8))
    if tile_h >= H:
        return H                               # full-extent block (always legal)
    return tile_h


def image_interpolate(x_s, x_t, mask2d, box_s, lam, c_fac, s_fac, b_fac,
                      *, vmem_budget_bytes=24 << 20, vmem_limit_bytes=48 << 20):
    """x_s, x_t: (3,H,W) f32 in [0,1]; mask2d: (H,W) f32; box_s static python
    ints (x0,y0,x1,y1); lam/c/s/b python floats.  Returns (3,H,W) f32."""
    x_s = jnp.asarray(x_s, jnp.float32)
    x_t = jnp.asarray(x_t, jnp.float32)
    mask2d = jnp.asarray(mask2d, jnp.float32)
    C, H, W = x_s.shape
    assert C == 3
    x0, y0, x1, y1 = (int(v) for v in box_s)

    # Rows that can differ from x_s: mask / x_t are identically zero outside
    # rows [y0, y1] (border softening touches row y1), so restrict the grid.
    row_lo = max(0, min(y0, H))
    row_hi = max(0, min(y1 + 1, H))
    if row_hi <= row_lo:
        return x_s                             # out == x_s everywhere

    # adjust_contrast mean: grayscale mean over the zero-padded canvas equals
    # the sum over the static box region / (H*W)  -> no full-canvas pass.
    tb = x_t[:, max(0, y0):max(0, min(y1, H)), max(0, x0):max(0, min(x1, W))]
    gray_sum = jnp.sum(_GRAY_R * tb[0] + _GRAY_G * tb[1] + _GRAY_B * tb[2])
    mean_gray = gray_sum / float(H * W)

    c = jnp.float32(c_fac)
    coff = ((1.0 - c) * mean_gray).astype(jnp.float32)
    params = jnp.stack([c, coff, jnp.float32(s_fac), jnp.float32(b_fac),
                        jnp.float32(lam)])

    tile_h = _choose_tile_h(H, W, row_hi - row_lo, vmem_budget_bytes)
    blk_lo = row_lo // tile_h
    blk_hi = -(-row_hi // tile_h)              # ceil
    grid = (blk_hi - blk_lo,)

    img_spec = pl.BlockSpec((C, tile_h, W), lambda i: (0, i + blk_lo, 0))
    msk_spec = pl.BlockSpec((tile_h, W), lambda i: (i + blk_lo, 0))

    return pl.pallas_call(
        _interp_kernel,
        out_shape=jax.ShapeDtypeStruct((C, H, W), jnp.float32),
        grid=grid,
        in_specs=[
            pl.BlockSpec(memory_space=pltpu.MemorySpace.SMEM),  # params
            img_spec,                                           # x_s
            img_spec,                                           # x_t (canvas)
            msk_spec,                                           # raw mask
        ],
        out_specs=img_spec,
        # Output aliases x_s: row tiles outside the box are never read from
        # x_t/mask nor rewritten -- they keep their x_s values in-place.
        input_output_aliases={1: 0},
        compiler_params=pltpu.CompilerParams(
            dimension_semantics=("parallel",),
            vmem_limit_bytes=vmem_limit_bytes,
        ),
    )(params, x_s, x_t, mask2d)


def generate_mask(shape_hw, box, border_softening):
    """Exact replica of ImageInterpolator.generate_mask, single channel (H,W)."""
    mask = np.zeros(shape_hw, np.float32)
    mask[box[1]:box[3], box[0]:box[2]] = 1.0
    for i in range(border_softening):
        smoothed = 1.0 - float(i) / border_softening
        mask[box[1] + i, box[0]:box[2]] = 1.0 - smoothed
        mask[box[1]:box[3], box[0] + i] = 1.0 - smoothed
        mask[box[3] - i, box[0]:box[2]] = 1.0 - smoothed
        mask[box[1]:box[3], box[2] - i] = 1.0 - smoothed
    for i in range(border_softening):
        for j in range(border_softening):
            smoothed = max(float(i + j) / border_softening - 1.0, 0.0)
            mask[box[1] + i, box[0] + j] = smoothed
            mask[box[1] + i, box[2] - j] = smoothed
            mask[box[3] - i, box[0] + j] = smoothed
            mask[box[3] - i, box[2] - j] = smoothed
    return np.clip(mask, 0.0, 1.0)


if __name__ == "__main__":
    key = jax.random.PRNGKey(0)
    k1, k2, k3 = jax.random.split(key, 3)

    C, H, W = 3, 48, 48
    # Deterministic synthetic "images" in [0, 1] (stand-ins for PIL_to_torch outputs).
    x_s = jax.random.uniform(k1, (C, H, W), jnp.float32)       # source image
    x_t_full = jax.random.uniform(k2, (C, H, W), jnp.float32)  # target image

    # Parameter vector v (16,): box / softening entries are valid integer coords.
    v = np.array(jax.random.normal(k3, (16,), jnp.float32) * 0.5)
    v[0:4] = [6.0, 9.0, 38.0, 41.0]   # box_s = (x0, y0, x1, y1)
    v[4:8] = [3.0, 3.0, 27.0, 27.0]   # box_t
    v[8] = 3.0                        # border_softening

    box_s = [int(v[i]) for i in range(4)]
    box_t = [int(v[i]) for i in range(4, 8)]
    border_softening = int(v[8])
    lam = float(1.0 / (1.0 + np.exp(-v[9])))          # torch.sigmoid(v[9])
    c_fac = float(np.exp(v[13]))                      # contrast
    s_fac = float(np.exp(v[14]))                      # saturation
    b_fac = float(np.exp(v[15]))                      # brightness

    width = box_s[2] - box_s[0]
    height = box_s[3] - box_s[1]

    # Host-side glue, matching the module's data-dependent (.item()) control flow.
    # PIL-style crop of target: (left, upper, right, lower) -> [:, upper:lower, left:right]
    cropped = np.array(x_t_full)[:, box_t[1]:box_t[3], box_t[0]:box_t[2]]
    # TODO(synk): PIL .resize defaults to bicubic resampling; bilinear used here (glue, not hot path).
    resized = jax.image.resize(jnp.asarray(cropped), (C, height, width), method="bilinear")

    # Paste resized target crop into a zeros canvas at box_s.
    x_t = np.zeros((C, H, W), np.float32)
    x_t[:, box_s[1]:box_s[3], box_s[0]:box_s[2]] = np.array(resized)

    mask2d = generate_mask((H, W), box_s, border_softening)

    x_s_np = np.array(x_s)            # keep a host copy for the reference

    out = image_interpolate(
        x_s, jnp.asarray(x_t), jnp.asarray(mask2d), box_s,
        lam, c_fac, s_fac, b_fac)
    out = jax.block_until_ready(out)

    # Pure-numpy reference in the original module's algebraic form.
    x_t_np = np.array(x_t)
    gray = _GRAY_R * x_t_np[0] + _GRAY_G * x_t_np[1] + _GRAY_B * x_t_np[2]
    t1 = np.clip(c_fac * x_t_np + (1.0 - c_fac) * gray.mean(), 0.0, 1.0)
    gray1 = _GRAY_R * t1[0] + _GRAY_G * t1[1] + _GRAY_B * t1[2]
    t2 = np.clip(s_fac * t1 + (1.0 - s_fac) * gray1[None], 0.0, 1.0)
    t3 = np.clip(b_fac * t2, 0.0, 1.0)
    mask3 = np.broadcast_to(mask2d, (C, H, W))
    ref = mask3 * (lam * t3 + (1.0 - lam) * x_s_np) + (1.0 - mask3) * x_s_np
    assert np.allclose(np.array(out), ref, atol=1e-5), "mismatch vs reference"

    print("KERNEL_OK")
</pallas_src>

<mosaic_0001>
module attributes {stable_mosaic.version = 11 : i64} {
  func.func @_interp_kernel(%arg0: i32, %arg1: memref<5xf32, #tpu.memory_space<smem>>, %arg2: memref<3x24x48xf32, #tpu.memory_space<vmem>>, %arg3: memref<3x24x48xf32, #tpu.memory_space<vmem>>, %arg4: memref<24x48xf32, #tpu.memory_space<vmem>>, %arg5: memref<3x24x48xf32, #tpu.memory_space<vmem>>) attributes {dimension_semantics = [#tpu.dimension_semantics<parallel>], iteration_bounds = array<i64: 2>, scalar_prefetch = 0 : i64, scratch_operands = 0 : i64, tpu.core_type = #tpu.core_type<tc>, window_params = [{transform_indices = @transform_0, window_bounds = array<i64: 5>}, {transform_indices = @transform_1, window_bounds = array<i64: 3, 24, 48>}, {transform_indices = @transform_2, window_bounds = array<i64: 3, 24, 48>}, {transform_indices = @transform_3, window_bounds = array<i64: 24, 48>}, {transform_indices = @transform_4, window_bounds = array<i64: 3, 24, 48>}]} {
    %c0 = arith.constant 0 : index
    %0 = memref.load %arg1[%c0] : memref<5xf32, #tpu.memory_space<smem>>
    %c1 = arith.constant 1 : index
    %1 = memref.load %arg1[%c1] : memref<5xf32, #tpu.memory_space<smem>>
    %c2 = arith.constant 2 : index
    %2 = memref.load %arg1[%c2] : memref<5xf32, #tpu.memory_space<smem>>
    %c3 = arith.constant 3 : index
    %3 = memref.load %arg1[%c3] : memref<5xf32, #tpu.memory_space<smem>>
    %c4 = arith.constant 4 : index
    %4 = memref.load %arg1[%c4] : memref<5xf32, #tpu.memory_space<smem>>
    %c0_0 = arith.constant 0 : index
    %c0_1 = arith.constant 0 : index
    %5 = vector.load %arg4[%c0_0, %c0_1] : memref<24x48xf32, #tpu.memory_space<vmem>>, vector<24x48xf32>
    %6 = vector.broadcast %4 : f32 to vector<24x48xf32>
    %7 = arith.mulf %6, %5 : vector<24x48xf32>
    %c0_2 = arith.constant 0 : index
    %c0_3 = arith.constant 0 : index
    %c0_4 = arith.constant 0 : index
    %8 = vector.load %arg3[%c0_2, %c0_3, %c0_4] : memref<3x24x48xf32, #tpu.memory_space<vmem>>, vector<1x24x48xf32>
    %9 = vector.shape_cast %8 : vector<1x24x48xf32> to vector<24x48xf32>
    %10 = vector.broadcast %0 : f32 to vector<24x48xf32>
    %11 = arith.mulf %10, %9 : vector<24x48xf32>
    %12 = vector.broadcast %1 : f32 to vector<24x48xf32>
    %13 = arith.addf %11, %12 : vector<24x48xf32>
    %cst = arith.constant 0.000000e+00 : f32
    %cst_5 = arith.constant 1.000000e+00 : f32
    %14 = vector.broadcast %cst : f32 to vector<24x48xf32>
    %15 = arith.maximumf %14, %13 : vector<24x48xf32>
    %16 = vector.broadcast %cst_5 : f32 to vector<24x48xf32>
    %17 = arith.minimumf %16, %15 : vector<24x48xf32>
    %c1_6 = arith.constant 1 : index
    %c0_7 = arith.constant 0 : index
    %c0_8 = arith.constant 0 : index
    %18 = vector.load %arg3[%c1_6, %c0_7, %c0_8] : memref<3x24x48xf32, #tpu.memory_space<vmem>>, vector<1x24x48xf32>
    %19 = vector.shape_cast %18 : vector<1x24x48xf32> to vector<24x48xf32>
    %20 = vector.broadcast %0 : f32 to vector<24x48xf32>
    %21 = arith.mulf %20, %19 : vector<24x48xf32>
    %22 = vector.broadcast %1 : f32 to vector<24x48xf32>
    %23 = arith.addf %21, %22 : vector<24x48xf32>
    %cst_9 = arith.constant 0.000000e+00 : f32
    %cst_10 = arith.constant 1.000000e+00 : f32
    %24 = vector.broadcast %cst_9 : f32 to vector<24x48xf32>
    %25 = arith.maximumf %24, %23 : vector<24x48xf32>
    %26 = vector.broadcast %cst_10 : f32 to vector<24x48xf32>
    %27 = arith.minimumf %26, %25 : vector<24x48xf32>
    %c2_11 = arith.constant 2 : index
    %c0_12 = arith.constant 0 : index
    %c0_13 = arith.constant 0 : index
    %28 = vector.load %arg3[%c2_11, %c0_12, %c0_13] : memref<3x24x48xf32, #tpu.memory_space<vmem>>, vector<1x24x48xf32>
    %29 = vector.shape_cast %28 : vector<1x24x48xf32> to vector<24x48xf32>
    %30 = vector.broadcast %0 : f32 to vector<24x48xf32>
    %31 = arith.mulf %30, %29 : vector<24x48xf32>
    %32 = vector.broadcast %1 : f32 to vector<24x48xf32>
    %33 = arith.addf %31, %32 : vector<24x48xf32>
    %cst_14 = arith.constant 0.000000e+00 : f32
    %cst_15 = arith.constant 1.000000e+00 : f32
    %34 = vector.broadcast %cst_14 : f32 to vector<24x48xf32>
    %35 = arith.maximumf %34, %33 : vector<24x48xf32>
    %36 = vector.broadcast %cst_15 : f32 to vector<24x48xf32>
    %37 = arith.minimumf %36, %35 : vector<24x48xf32>
    %cst_16 = arith.constant 2.989000e-01 : f32
    %38 = vector.broadcast %cst_16 : f32 to vector<24x48xf32>
    %39 = arith.mulf %38, %17 : vector<24x48xf32>
    %cst_17 = arith.constant 5.870000e-01 : f32
    %40 = vector.broadcast %cst_17 : f32 to vector<24x48xf32>
    %41 = arith.mulf %40, %27 : vector<24x48xf32>
    %42 = arith.addf %39, %41 : vector<24x48xf32>
    %cst_18 = arith.constant 1.140000e-01 : f32
    %43 = vector.broadcast %cst_18 : f32 to vector<24x48xf32>
    %44 = arith.mulf %43, %37 : vector<24x48xf32>
    %45 = arith.addf %42, %44 : vector<24x48xf32>
    %cst_19 = arith.constant 1.000000e+00 : f32
    %46 = arith.subf %cst_19, %2 : f32
    %47 = vector.broadcast %46 : f32 to vector<24x48xf32>
    %48 = arith.mulf %47, %45 : vector<24x48xf32>
    %49 = vector.broadcast %2 : f32 to vector<24x48xf32>
    %50 = arith.mulf %49, %17 : vector<24x48xf32>
    %51 = arith.addf %50, %48 : vector<24x48xf32>
    %cst_20 = arith.constant 0.000000e+00 : f32
    %cst_21 = arith.constant 1.000000e+00 : f32
    %52 = vector.broadcast %cst_20 : f32 to vector<24x48xf32>
    %53 = arith.maximumf %52, %51 : vector<24x48xf32>
    %54 = vector.broadcast %cst_21 : f32 to vector<24x48xf32>
    %55 = arith.minimumf %54, %53 : vector<24x48xf32>
    %56 = vector.broadcast %3 : f32 to vector<24x48xf32>
    %57 = arith.mulf %56, %55 : vector<24x48xf32>
    %cst_22 = arith.constant 0.000000e+00 : f32
    %cst_23 = arith.constant 1.000000e+00 : f32
    %58 = vector.broadcast %cst_22 : f32 to vector<24x48xf32>
    %59 = arith.maximumf %58, %57 : vector<24x48xf32>
    %60 = vector.broadcast %cst_23 : f32 to vector<24x48xf32>
    %61 = arith.minimumf %60, %59 : vector<24x48xf32>
    %c0_24 = arith.constant 0 : index
    %c0_25 = arith.constant 0 : index
    %c0_26 = arith.constant 0 : index
    %62 = vector.load %arg2[%c0_24, %c0_25, %c0_26] : memref<3x24x48xf32, #tpu.memory_space<vmem>>, vector<1x24x48xf32>
    %63 = vector.shape_cast %62 : vector<1x24x48xf32> to vector<24x48xf32>
    %64 = arith.subf %61, %63 : vector<24x48xf32>
    %65 = arith.mulf %7, %64 : vector<24x48xf32>
    %66 = arith.addf %65, %63 : vector<24x48xf32>
    %c0_27 = arith.constant 0 : index
    %c0_28 = arith.constant 0 : index
    %c0_29 = arith.constant 0 : index
    %67 = vector.load %arg5[%c0_27, %c0_28, %c0_29] : memref<3x24x48xf32, #tpu.memory_space<vmem>>, vector<1x24x48xf32>
    %68 = vector.shape_cast %67 : vector<1x24x48xf32> to vector<24x48xf32>
    %69 = vector.shape_cast %66 : vector<24x48xf32> to vector<1x24x48xf32>
    tpu.vector_store %arg5[%c0_27, %c0_28, %c0_29], %69 {strides = array<i32>} : memref<3x24x48xf32, #tpu.memory_space<vmem>>, vector<1x24x48xf32>,
    %70 = vector.broadcast %2 : f32 to vector<24x48xf32>
    %71 = arith.mulf %70, %27 : vector<24x48xf32>
    %72 = arith.addf %71, %48 : vector<24x48xf32>
    %cst_30 = arith.constant 0.000000e+00 : f32
    %cst_31 = arith.constant 1.000000e+00 : f32
    %73 = vector.broadcast %cst_30 : f32 to vector<24x48xf32>
    %74 = arith.maximumf %73, %72 : vector<24x48xf32>
    %75 = vector.broadcast %cst_31 : f32 to vector<24x48xf32>
    %76 = arith.minimumf %75, %74 : vector<24x48xf32>
    %77 = vector.broadcast %3 : f32 to vector<24x48xf32>
    %78 = arith.mulf %77, %76 : vector<24x48xf32>
    %cst_32 = arith.constant 0.000000e+00 : f32
    %cst_33 = arith.constant 1.000000e+00 : f32
    %79 = vector.broadcast %cst_32 : f32 to vector<24x48xf32>
    %80 = arith.maximumf %79, %78 : vector<24x48xf32>
    %81 = vector.broadcast %cst_33 : f32 to vector<24x48xf32>
    %82 = arith.minimumf %81, %80 : vector<24x48xf32>
    %c1_34 = arith.constant 1 : index
    %c0_35 = arith.constant 0 : index
    %c0_36 = arith.constant 0 : index
    %83 = vector.load %arg2[%c1_34, %c0_35, %c0_36] : memref<3x24x48xf32, #tpu.memory_space<vmem>>, vector<1x24x48xf32>
    %84 = vector.shape_cast %83 : vector<1x24x48xf32> to vector<24x48xf32>
    %85 = arith.subf %82, %84 : vector<24x48xf32>
    %86 = arith.mulf %7, %85 : vector<24x48xf32>
    %87 = arith.addf %86, %84 : vector<24x48xf32>
    %c1_37 = arith.constant 1 : index
    %c0_38 = arith.constant 0 : index
    %c0_39 = arith.constant 0 : index
    %88 = vector.load %arg5[%c1_37, %c0_38, %c0_39] : memref<3x24x48xf32, #tpu.memory_space<vmem>>, vector<1x24x48xf32>
    %89 = vector.shape_cast %88 : vector<1x24x48xf32> to vector<24x48xf32>
    %90 = vector.shape_cast %87 : vector<24x48xf32> to vector<1x24x48xf32>
    tpu.vector_store %arg5[%c1_37, %c0_38, %c0_39], %90 {strides = array<i32>} : memref<3x24x48xf32, #tpu.memory_space<vmem>>, vector<1x24x48xf32>,
    %91 = vector.broadcast %2 : f32 to vector<24x48xf32>
    %92 = arith.mulf %91, %37 : vector<24x48xf32>
    %93 = arith.addf %92, %48 : vector<24x48xf32>
    %cst_40 = arith.constant 0.000000e+00 : f32
    %cst_41 = arith.constant 1.000000e+00 : f32
    %94 = vector.broadcast %cst_40 : f32 to vector<24x48xf32>
    %95 = arith.maximumf %94, %93 : vector<24x48xf32>
    %96 = vector.broadcast %cst_41 : f32 to vector<24x48xf32>
    %97 = arith.minimumf %96, %95 : vector<24x48xf32>
    %98 = vector.broadcast %3 : f32 to vector<24x48xf32>
    %99 = arith.mulf %98, %97 : vector<24x48xf32>
    %cst_42 = arith.constant 0.000000e+00 : f32
    %cst_43 = arith.constant 1.000000e+00 : f32
    %100 = vector.broadcast %cst_42 : f32 to vector<24x48xf32>
    %101 = arith.maximumf %100, %99 : vector<24x48xf32>
    %102 = vector.broadcast %cst_43 : f32 to vector<24x48xf32>
    %103 = arith.minimumf %102, %101 : vector<24x48xf32>
    %c2_44 = arith.constant 2 : index
    %c0_45 = arith.constant 0 : index
    %c0_46 = arith.constant 0 : index
    %104 = vector.load %arg2[%c2_44, %c0_45, %c0_46] : memref<3x24x48xf32, #tpu.memory_space<vmem>>, vector<1x24x48xf32>
    %105 = vector.shape_cast %104 : vector<1x24x48xf32> to vector<24x48xf32>
    %106 = arith.subf %103, %105 : vector<24x48xf32>
    %107 = arith.mulf %7, %106 : vector<24x48xf32>
    %108 = arith.addf %107, %105 : vector<24x48xf32>
    %c2_47 = arith.constant 2 : index
    %c0_48 = arith.constant 0 : index
    %c0_49 = arith.constant 0 : index
    %109 = vector.load %arg5[%c2_47, %c0_48, %c0_49] : memref<3x24x48xf32, #tpu.memory_space<vmem>>, vector<1x24x48xf32>
    %110 = vector.shape_cast %109 : vector<1x24x48xf32> to vector<24x48xf32>
    %111 = vector.shape_cast %108 : vector<24x48xf32> to vector<1x24x48xf32>
    tpu.vector_store %arg5[%c2_47, %c0_48, %c0_49], %111 {strides = array<i32>} : memref<3x24x48xf32, #tpu.memory_space<vmem>>, vector<1x24x48xf32>,
    return
  }
  func.func @transform_0(%arg0: i32) -> i32 {
    %c0_i32 = arith.constant 0 : i32
    %c0_i32_0 = arith.constant 0 : i32
    return %c0_i32 : i32
  }
  func.func @transform_1(%arg0: i32) -> (i32, i32, i32) {
    %c0_i32 = arith.constant 0 : i32
    %0 = arith.addi %arg0, %c0_i32 : i32
    %c0_i32_0 = arith.constant 0 : i32
    %c0_i32_1 = arith.constant 0 : i32
    %c0_i32_2 = arith.constant 0 : i32
    return %c0_i32_0, %0, %c0_i32_1 : i32, i32, i32
  }
  func.func @transform_2(%arg0: i32) -> (i32, i32, i32) {
    %c0_i32 = arith.constant 0 : i32
    %0 = arith.addi %arg0, %c0_i32 : i32
    %c0_i32_0 = arith.constant 0 : i32
    %c0_i32_1 = arith.constant 0 : i32
    %c0_i32_2 = arith.constant 0 : i32
    return %c0_i32_0, %0, %c0_i32_1 : i32, i32, i32
  }
  func.func @transform_3(%arg0: i32) -> (i32, i32) {
    %c0_i32 = arith.constant 0 : i32
    %0 = arith.addi %arg0, %c0_i32 : i32
    %c0_i32_0 = arith.constant 0 : i32
    %c0_i32_1 = arith.constant 0 : i32
    return %0, %c0_i32_0 : i32, i32
  }
  func.func @transform_4(%arg0: i32) -> (i32, i32, i32) {
    %c0_i32 = arith.constant 0 : i32
    %0 = arith.addi %arg0, %c0_i32 : i32
    %c0_i32_0 = arith.constant 0 : i32
    %c0_i32_1 = arith.constant 0 : i32
    %c0_i32_2 = arith.constant 0 : i32
    return %c0_i32_0, %0, %c0_i32_1 : i32, i32, i32
  }
}

</mosaic_0001>

<llo_original>
// kernel: tpu_custom_call.1
$region0: #{tpu_custom_call.1}
  #allocation0 [shape = 'u32[]', space=smem, size = 0x4, offset = 0x4, fixed_abs, tag = 'smem constant byte address 0x4 - core index']
  #allocation1 [shape = 'u32[144,128]{1,0:T(1,128)}', space=vmem, size = 0x12000, scoped, tag = 'internal scratch']
  #allocation9 [shape = 's32[]', space=sflag, size = 0x4, offset = 0, fixed_abs, tag = 'sflag constant byte address 0x0 - dummy sync flag']
  #allocation11 [shape = 's32[]', space=sflag, size = 0x4, offset = 0, fixed_abs, tag = 'sflag constant byte address 0x0 - dummy sync flag']
  %s0 = inlined_call_operand.vmem [shape: f32[5], index: 0, kind: input, shape index: {}]
  %s1 = inlined_call_operand.hbm [shape: f32[3,48,48], index: 1, kind: input, shape index: {}, may-alias: {1,4}]
  %s2 = inlined_call_operand.vmem [shape: f32[3,48,48], index: 2, kind: input, shape index: {}]
  %s3 = inlined_call_operand.vmem [shape: f32[48,48], index: 3, kind: input, shape index: {}]
  %s4 = inlined_call_operand.hbm [shape: f32[3,48,48], index: 4, kind: output, shape index: {}, may-alias: {1,4}]
  %s5 = sld [smem:[#allocation0]]
  $region95: #{tpu_custom_call.1} parent=0
    _
  %s7 = ssub.s32 1, %s5
  %s8 = scalar_select 0, %s7, %s5
  $region1: #{tpu_custom_call.1} parent=0
    #allocation2 [shape = 'u8[512]{0}', space=smem, size = 0x200, scoped, tag = 'input window, operand 0, single buffered']
    #allocation3 [shape = 's32[2]{0}', space=sflag, size = 0x8, scoped, tag = 'scoped memory for tpu_custom_call.1']
    #allocation4 [shape = 's32[2]{0}', space=sflag, size = 0x8, scoped, tag = 'scoped memory for tpu_custom_call.1']
    #allocation5 [shape = 's32[2]{0}', space=sflag, size = 0x8, scoped, tag = 'scoped memory for tpu_custom_call.1']
    #allocation6 [shape = 'u8[73728]{0}', space=vmem, size = 0x12000, scoped, tag = 'input window, operand 1']
    #allocation7 [shape = 'u8[73728]{0}', space=vmem, size = 0x12000, scoped, tag = 'input window, operand 2']
    #allocation8 [shape = 'u8[73728]{0}', space=vmem, size = 0x12000, scoped, tag = 'output window, operand 0']
    %9 = vsyncpa [#allocation5], 0
    %10 = vsyncpa [#allocation3], 0
    %s11 = scalar_lea.sflag [#allocation3], 1
    %12 = vsyncpa %s11, 0
    %13 = vsyncpa [#allocation4], 0
    %s14 = scalar_lea.sflag [#allocation4], 1
    %15 = vsyncpa %s14, 0
    loop: start=0, step=1, limit=4
    $region2: #{tpu_custom_call.1} parent=1 // loop_pre_header
      _
    $region3: #{tpu_custom_call.1} parent=1 // loop_header
      %s17 = sphi 0, %s21
      %p18 = scmp.ge.s32.totalorder %s17, 4
      %s25 = sphi 0, %s25
      %s27 = sphi 0, %s25
      %s28 = sphi 0, %s27
      %s42 = sphi 0, %s28
      %s48 = sphi 0, %s50
      %s51 = sphi 0, %s48
      %s52 = sphi 0, %s51
      %s68 = sphi 0, %s52
      %s74 = sphi 0, %s76
      %s77 = sphi 0, %s74
      %s78 = sphi 0, %s77
      %s94 = sphi 0, %s78
      %s100 = sphi 0, %s102
      %s103 = sphi 0, %s100
      %s104 = sphi 0, %s103
      %s120 = sphi 0, %s104
      %s126 = sphi 0, %s128
      %s129 = sphi 0, %s126
      %s130 = sphi 0, %s129
      %s146 = sphi 0, %s130
    $region4: #{tpu_custom_call.1} parent=1 // loop_header_branch
      %20 = sbr.rel (%p18) target = $region8
    $region5: #{tpu_custom_call.1} parent=1 // loop_body
      %s22 = ssub.s32 %s17, 1
      %s23 = ssub.s32 %s17, 2
      %s24 = sadd.s32 %s17, 1
      %s26 = sadd.s32 %s25, 1
      %p29 = scmp.eq.s32.totalorder %s17, 1
      %p30 = scmp.ne.s32.totalorder %s25, %s27
      %p31 = scmp.eq.s32.totalorder %s17, 0
      %p32 = por %p30, %p31
      %p33 = scmp.ne.s32.totalorder %s25, %s27
      %p34 = scmp.eq.s32.totalorder %s22, 1
      %p35 = por %p33, %p34
      %p36 = scmp.ne.s32.totalorder %s27, %s28
      %p37 = scmp.eq.s32.totalorder %s22, 0
      %p38 = por %p36, %p37
      %p39 = scmp.ne.s32.totalorder %s27, %s28
      %p40 = scmp.eq.s32.totalorder %s23, 1
      %p41 = por %p39, %p40
      %p43 = scmp.ne.s32.totalorder %s28, %s42
      %p44 = scmp.eq.s32.totalorder %s23, 0
      %p45 = por %p43, %p44
      %s46 = ssub.s32 %s17, %s24
      %p47 = scmp.eq.s32.totalorder %s46, 0
      %s49 = sadd.s32 %s48, 1
      %s50 = scalar_select %p47, %s48, %s49
      %p53 = pneg %p47
      %p54 = scmp.eq.s32.totalorder %s17, 1
      %p55 = por %p53, %p54
      %p56 = scmp.ne.s32.totalorder %s48, %s51
      %p57 = scmp.eq.s32.totalorder %s17, 0
      %p58 = por %p56, %p57
      %p59 = scmp.ne.s32.totalorder %s48, %s51
      %p60 = scmp.eq.s32.totalorder %s22, 1
      %p61 = por %p59, %p60
      %p62 = scmp.ne.s32.totalorder %s51, %s52
      %p63 = scmp.eq.s32.totalorder %s22, 0
      %p64 = por %p62, %p63
      %p65 = scmp.ne.s32.totalorder %s51, %s52
      %p66 = scmp.eq.s32.totalorder %s23, 1
      %p67 = por %p65, %p66
      %p69 = scmp.ne.s32.totalorder %s52, %s68
      %p70 = scmp.eq.s32.totalorder %s23, 0
      %p71 = por %p69, %p70
      %s72 = ssub.s32 %s17, %s24
      %p73 = scmp.eq.s32.totalorder %s72, 0
      %s75 = sadd.s32 %s74, 1
      %s76 = scalar_select %p73, %s74, %s75
      %p79 = pneg %p73
      %p80 = scmp.eq.s32.totalorder %s17, 1
      %p81 = por %p79, %p80
      %p82 = scmp.ne.s32.totalorder %s74, %s77
      %p83 = scmp.eq.s32.totalorder %s17, 0
      %p84 = por %p82, %p83
      %p85 = scmp.ne.s32.totalorder %s74, %s77
      %p86 = scmp.eq.s32.totalorder %s22, 1
      %p87 = por %p85, %p86
      %p88 = scmp.ne.s32.totalorder %s77, %s78
      %p89 = scmp.eq.s32.totalorder %s22, 0
      %p90 = por %p88, %p89
      %p91 = scmp.ne.s32.totalorder %s77, %s78
      %p92 = scmp.eq.s32.totalorder %s23, 1
      %p93 = por %p91, %p92
      %p95 = scmp.ne.s32.totalorder %s78, %s94
      %p96 = scmp.eq.s32.totalorder %s23, 0
      %p97 = por %p95, %p96
      %s98 = ssub.s32 %s17, %s24
      %p99 = scmp.eq.s32.totalorder %s98, 0
      %s101 = sadd.s32 %s100, 1
      %s102 = scalar_select %p99, %s100, %s101
      %p105 = pneg %p99
      %p106 = scmp.eq.s32.totalorder %s17, 1
      %p107 = por %p105, %p106
      %p108 = scmp.ne.s32.totalorder %s100, %s103
      %p109 = scmp.eq.s32.totalorder %s17, 0
      %p110 = por %p108, %p109
      %p111 = scmp.ne.s32.totalorder %s100, %s103
      %p112 = scmp.eq.s32.totalorder %s22, 1
      %p113 = por %p111, %p112
      %p114 = scmp.ne.s32.totalorder %s103, %s104
      %p115 = scmp.eq.s32.totalorder %s22, 0
      %p116 = por %p114, %p115
      %p117 = scmp.ne.s32.totalorder %s103, %s104
      %p118 = scmp.eq.s32.totalorder %s23, 1
      %p119 = por %p117, %p118
      %p121 = scmp.ne.s32.totalorder %s104, %s120
      %p122 = scmp.eq.s32.totalorder %s23, 0
      %p123 = por %p121, %p122
      %s124 = ssub.s32 %s17, %s24
      %p125 = scmp.eq.s32.totalorder %s124, 0
      %s127 = sadd.s32 %s126, 1
      %s128 = scalar_select %p125, %s126, %s127
      %p131 = pneg %p125
      %p132 = scmp.eq.s32.totalorder %s17, 1
      %p133 = por %p131, %p132
      %p134 = scmp.ne.s32.totalorder %s126, %s129
      %p135 = scmp.eq.s32.totalorder %s17, 0
      %p136 = por %p134, %p135
      %p137 = scmp.ne.s32.totalorder %s126, %s129
      %p138 = scmp.eq.s32.totalorder %s22, 1
      %p139 = por %p137, %p138
      %p140 = scmp.ne.s32.totalorder %s129, %s130
      %p141 = scmp.eq.s32.totalorder %s22, 0
      %p142 = por %p140, %p141
      %p143 = scmp.ne.s32.totalorder %s129, %s130
      %p144 = scmp.eq.s32.totalorder %s23, 1
      %p145 = por %p143, %p144
      %p147 = scmp.ne.s32.totalorder %s130, %s146
      %p148 = scmp.eq.s32.totalorder %s23, 0
      %p149 = por %p147, %p148
      %p150 = scmp.le.s32.totalorder 1, %s17
      %p151 = scmp.lt.s32.totalorder %s17, 3
      %p152 = pnand %p150, %p151
      %p153 = pneg %p152
      // Predicated region
      $region9: #{tpu_custom_call.1} parent=5 // pred_check
        _
      $region10: #{tpu_custom_call.1} parent=5 // pred_check_branch
        %155 = sbr.rel (%p152) target = $region12
      $region11: #{tpu_custom_call.1} parent=5 // pred_region
        %s156 = ssub.s32 %s17, 1
        // Predicated region
        $region13: #{tpu_custom_call.1} parent=11 // pred_check
          %p157 = pneg %p38
        $region14: #{tpu_custom_call.1} parent=11 // pred_check_branch
          %159 = sbr.rel (%p157) target = $region16
        $region15: #{tpu_custom_call.1} parent=11 // pred_region
          %s161 = ssub.s32 16, 16
          %162 = vsyncadd [#allocation5], %s161
          %s164 = sshll.u32 %s0, 4
          %s165 = int_to_ptr.vmem [resolvable:$true] %s164
          %167 = dma.vmem_to_smem %s165, 16, [#allocation2], [#allocation5]
        $region16: #{tpu_custom_call.1} parent=11 // pred_fallthru
          _
      $region12: #{tpu_custom_call.1} parent=5 // pred_fallthru
        _
      %p168 = scmp.lt.s32.totalorder %s17, 2
      // Predicated region
      $region17: #{tpu_custom_call.1} parent=5 // pred_check
        %p169 = pneg %p168
      $region18: #{tpu_custom_call.1} parent=5 // pred_check_branch
        %171 = sbr.rel (%p169) target = $region20
      $region19: #{tpu_custom_call.1} parent=5 // pred_region
        // Predicated region
        $region21: #{tpu_custom_call.1} parent=19 // pred_check
          %p172 = pneg %p58
        $region22: #{tpu_custom_call.1} parent=19 // pred_check_branch
          %174 = sbr.rel (%p172) target = $region24
        $region23: #{tpu_custom_call.1} parent=19 // pred_region
          #allocation10 [shape = 'u32[6]{0}', space=smem, size = 0x18, scoped, tag = 'DMA stride descriptor']
          %s175 = sand.u32 %s48, 1
          %s176 = scalar_lea.sflag [#allocation3], %s175
          %s177 = sand.u32 %s48, 1
          %s178 = smul.addr %s177, 72
          %s179 = scalar_lea.vmem [#allocation6], %s178
          %s180 = smul.u32 3, %s17
          %s182 = ssub.s32 1152, 1152
          %183 = vsyncadd %s176, %s182
          %s184 = smul.addr %s180, 128
          %s185 = scalar_lea.hbm %s1, %s184
          %s187 = sshll.u32 1, 14
          %s188 = sxor.u32 4294967295, %s187
          %s190 = sld [smem:[#allocation0]]
          %s191 = sadd.s32 2, %s190
          %s193 = sshll.u32 7, 26
          %s194 = sxor.u32 4294967295, %s193
          %s195 = sand.u32 0, %s194
          %s196 = sshll.u32 %s191, 26
          %s197 = sor.u32 %s195, %s196
          %s198 = sshll.u32 %s179, 4
          %s199 = int_to_ptr.vmem [resolvable:$true] %s198
          %205 = sst [smem:[#allocation10]] 768
          %s206 = scalar_lea.smem [#allocation10], 1
          %207 = sst [smem:[%s206]] 384
          %s208 = scalar_lea.smem [#allocation10], 2
          %209 = sst [smem:[%s208]] 3
          %s210 = scalar_lea.smem [#allocation10], 3
          %211 = sst [smem:[%s210]] 128
          %s212 = scalar_lea.smem [#allocation10], 4
          %213 = sst [smem:[%s212]] 128
          %s214 = scalar_lea.smem [#allocation10], 5
          %215 = sst [smem:[%s214]] 8
          %217 = dma.general %s185, 1152, %s199, %s176, [#allocation9], [#allocation10], %s197, 0
        $region24: #{tpu_custom_call.1} parent=19 // pred_fallthru
          _
        // Predicated region
        $region25: #{tpu_custom_call.1} parent=19 // pred_check
          %p218 = pneg %p84
        $region26: #{tpu_custom_call.1} parent=19 // pred_check_branch
          %220 = sbr.rel (%p218) target = $region28
        $region27: #{tpu_custom_call.1} parent=19 // pred_region
          %s221 = sand.u32 %s74, 1
          %s222 = sand.u32 %s74, 1
          %s223 = smul.addr %s222, 72
          %s224 = scalar_lea.vmem [#allocation7], %s223
          %s225 = smul.u32 3, %s17
          %s226 = smul.addr %s225, 8
          %s227 = scalar_lea.vmem %s2, %s226
          // Predicated region
          $region29: #{tpu_custom_call.1} parent=27 // pred_check
            _
          $region30: #{tpu_custom_call.1} parent=27 // pred_check_branch
            %229 = sbr.rel (0) target = $region32
          $region31: #{tpu_custom_call.1} parent=27 // pred_region
            // Predicated region
            $region33: #{tpu_custom_call.1} parent=31 // pred_check
              _
            $region34: #{tpu_custom_call.1} parent=31 // pred_check_branch
              %231 = sbr.rel (0) target = $region36
            $region35: #{tpu_custom_call.1} parent=31 // pred_region
              // Predicated region
              $region48: #{tpu_custom_call.1} parent=35 // pred_check
                _
              $region49: #{tpu_custom_call.1} parent=35 // pred_check_branch
                %262 = sbr.rel (0) target = $region51
              $region50: #{tpu_custom_call.1} parent=35 // pred_region
                loop: start=0, step=1, limit=1
                $region52: #{tpu_custom_call.1} parent=50 // loop_pre_header
                  _
                $region53: #{tpu_custom_call.1} parent=50 // loop_header
                  %s264 = sphi 0, %s268
                  %p265 = scmp.ge.s32.totalorder %s264, 1
                  %s269 = sphi %s227, %s227
                  %s270 = sphi %s224, %s224
                $region54: #{tpu_custom_call.1} parent=50 // loop_header_branch
                  %267 = sbr.rel (%p265) target = $region58
                $region55: #{tpu_custom_call.1} parent=50 // loop_body
                  %v271 = vld [vmem:[%s269] sm:$0xff]
                  %272 = vst [vmem:[%s270] sm:$0xff] %v271
                  %v273 = vld [vmem:[%s269 + $0x8] sm:$0xff]
                  %274 = vst [vmem:[%s270 + $0x8] sm:$0xff] %v273
                  %v275 = vld [vmem:[%s269 + $0x10] sm:$0xff]
                  %276 = vst [vmem:[%s270 + $0x10] sm:$0xff] %v275
                  %v277 = vld [vmem:[%s269 + $0x30] sm:$0xff]
                  %278 = vst [vmem:[%s270 + $0x18] sm:$0xff] %v277
                  %v279 = vld [vmem:[%s269 + $0x38] sm:$0xff]
                  %280 = vst [vmem:[%s270 + $0x20] sm:$0xff] %v279
                  %v281 = vld [vmem:[%s269 + $0x40] sm:$0xff]
                  %282 = vst [vmem:[%s270 + $0x28] sm:$0xff] %v281
                  %v283 = vld [vmem:[%s269 + $0x60] sm:$0xff]
                  %284 = vst [vmem:[%s270 + $0x30] sm:$0xff] %v283
                  %v285 = vld [vmem:[%s269 + $0x68] sm:$0xff]
                  %286 = vst [vmem:[%s270 + $0x38] sm:$0xff] %v285
                  %v287 = vld [vmem:[%s269 + $0x70] sm:$0xff]
                  %288 = vst [vmem:[%s270 + $0x40] sm:$0xff] %v287
                $region56: #{tpu_custom_call.1} parent=50 // loop_footer
                  %s268 = sadd.s32 1, %s264
                $region57: #{tpu_custom_call.1} parent=50 // loop_footer_branch
                  %263 = sbr.rel target = $region53
                $region58: #{tpu_custom_call.1} parent=50 // loop_exit
                  _
              $region51: #{tpu_custom_call.1} parent=35 // pred_fallthru
                _
              // Predicated region
              $region59: #{tpu_custom_call.1} parent=35 // pred_check
                _
              $region60: #{tpu_custom_call.1} parent=35 // pred_check_branch
                %290 = sbr.rel target = $region62
              $region61: #{tpu_custom_call.1} parent=35 // pred_region
                _
              $region62: #{tpu_custom_call.1} parent=35 // pred_fallthru
                _
            $region36: #{tpu_custom_call.1} parent=31 // pred_fallthru
              _
            // Predicated region
            $region37: #{tpu_custom_call.1} parent=31 // pred_check
              _
            $region38: #{tpu_custom_call.1} parent=31 // pred_check_branch
              %233 = sbr.rel target = $region40
            $region39: #{tpu_custom_call.1} parent=31 // pred_region
              loop: start=0, step=1, limit=1
              $region41: #{tpu_custom_call.1} parent=39 // loop_pre_header
                _
              $region42: #{tpu_custom_call.1} parent=39 // loop_header
                %s236 = sphi 0, %s240
                %p237 = scmp.ge.s32.totalorder %s236, 1
                %s241 = sphi %s227, %s227
                %s242 = sphi %s224, %s224
              $region43: #{tpu_custom_call.1} parent=39 // loop_header_branch
                %239 = sbr.rel (%p237) target = $region47
              $region44: #{tpu_custom_call.1} parent=39 // loop_body
                %v243 = vld [vmem:[%s241] sm:$0xff]
                %244 = vst [vmem:[%s242] sm:$0xff] %v243
                %v245 = vld [vmem:[%s241 + $0x8] sm:$0xff]
                %246 = vst [vmem:[%s242 + $0x8] sm:$0xff] %v245
                %v247 = vld [vmem:[%s241 + $0x10] sm:$0xff]
                %248 = vst [vmem:[%s242 + $0x10] sm:$0xff] %v247
                %v249 = vld [vmem:[%s241 + $0x30] sm:$0xff]
                %250 = vst [vmem:[%s242 + $0x18] sm:$0xff] %v249
                %v251 = vld [vmem:[%s241 + $0x38] sm:$0xff]
                %252 = vst [vmem:[%s242 + $0x20] sm:$0xff] %v251
                %v253 = vld [vmem:[%s241 + $0x40] sm:$0xff]
                %254 = vst [vmem:[%s242 + $0x28] sm:$0xff] %v253
                %v255 = vld [vmem:[%s241 + $0x60] sm:$0xff]
                %256 = vst [vmem:[%s242 + $0x30] sm:$0xff] %v255
                %v257 = vld [vmem:[%s241 + $0x68] sm:$0xff]
                %258 = vst [vmem:[%s242 + $0x38] sm:$0xff] %v257
                %v259 = vld [vmem:[%s241 + $0x70] sm:$0xff]
                %260 = vst [vmem:[%s242 + $0x40] sm:$0xff] %v259
              $region45: #{tpu_custom_call.1} parent=39 // loop_footer
                %s240 = sadd.s32 1, %s236
              $region46: #{tpu_custom_call.1} parent=39 // loop_footer_branch
                %235 = sbr.rel target = $region42
              $region47: #{tpu_custom_call.1} parent=39 // loop_exit
                _
            $region40: #{tpu_custom_call.1} parent=31 // pred_fallthru
              _
          $region32: #{tpu_custom_call.1} parent=27 // pred_fallthru
            _
          %291 = vnop
        $region28: #{tpu_custom_call.1} parent=19 // pred_fallthru
          _
        // Predicated region
        $region63: #{tpu_custom_call.1} parent=19 // pred_check
          %p292 = pneg %p110
        $region64: #{tpu_custom_call.1} parent=19 // pred_check_branch
          %294 = sbr.rel (%p292) target = $region66
        $region65: #{tpu_custom_call.1} parent=19 // pred_region
          %s295 = smul.u32 3, %s17
          %p296 = scmp.lt.s32.totalorder %s295, 5
          %s297 = scalar_select %p296, %s295, 5
          %s298 = smul.addr %s297, 8
          %s299 = scalar_lea.vmem %s3, %s298
          %s300 = smul.u32 3, %s17
        $region66: #{tpu_custom_call.1} parent=19 // pred_fallthru
          _
      $region20: #{tpu_custom_call.1} parent=5 // pred_fallthru
        _
      %p301 = scmp.le.s32.totalorder 1, %s17
      %p302 = scmp.lt.s32.totalorder %s17, 3
      %p303 = pnand %p301, %p302
      %p304 = pneg %p303
      // Predicated region
      $region67: #{tpu_custom_call.1} parent=5 // pred_check
        _
      $region68: #{tpu_custom_call.1} parent=5 // pred_check_branch
        %306 = sbr.rel (%p303) target = $region70
      $region69: #{tpu_custom_call.1} parent=5 // pred_region
        %s307 = ssub.s32 %s17, 1
        // Predicated region
        $region71: #{tpu_custom_call.1} parent=69 // pred_check
          %p308 = pneg %p38
        $region72: #{tpu_custom_call.1} parent=69 // pred_check_branch
          %310 = sbr.rel (%p308) target = $region74
        $region73: #{tpu_custom_call.1} parent=69 // pred_region
          %311 = dma.done [#allocation5], 16
        $region74: #{tpu_custom_call.1} parent=69 // pred_fallthru
          _
        %s312 = sand.u32 %s51, 1
        %s313 = scalar_lea.sflag [#allocation3], %s312
        %s314 = sand.u32 %s51, 1
        %s315 = smul.addr %s314, 72
        %s316 = scalar_lea.vmem [#allocation6], %s315
        // Predicated region
        $region75: #{tpu_custom_call.1} parent=69 // pred_check
          %p317 = pneg %p64
        $region76: #{tpu_custom_call.1} parent=69 // pred_check_branch
          %319 = sbr.rel (%p317) target = $region78
        $region77: #{tpu_custom_call.1} parent=69 // pred_region
          %320 = dma.done %s313, 1152
        $region78: #{tpu_custom_call.1} parent=69 // pred_fallthru
          _
        %s321 = sand.u32 %s77, 1
        %s322 = sand.u32 %s77, 1
        %s323 = smul.addr %s322, 72
        %s324 = scalar_lea.vmem [#allocation7], %s323
        // Predicated region
        $region79: #{tpu_custom_call.1} parent=69 // pred_check
          %p325 = pneg %p90
        $region80: #{tpu_custom_call.1} parent=69 // pred_check_branch
          %327 = sbr.rel (%p325) target = $region82
        $region81: #{tpu_custom_call.1} parent=69 // pred_region
          _
        $region82: #{tpu_custom_call.1} parent=69 // pred_fallthru
          _
        %328 = sfence
        %p329 = pneg %p38
        %p330 = pneg %p35
        %s331 = sand.u32 %s51, 1
        %s332 = scalar_lea.sflag [#allocation3], %s331
        %s333 = sand.u32 %s51, 1
        %s334 = smul.addr %s333, 72
        %s335 = scalar_lea.vmem [#allocation6], %s334
        %p336 = pneg %p64
        %p337 = pneg %p61
        %s338 = sand.u32 %s77, 1
        %s339 = sand.u32 %s77, 1
        %s340 = smul.addr %s339, 72
        %s341 = scalar_lea.vmem [#allocation7], %s340
        %p342 = pneg %p90
        %p343 = pneg %p87
        %s344 = smul.u32 3, %s22
        %p345 = scmp.lt.s32.totalorder %s344, 5
        %s346 = scalar_select %p345, %s344, 5
        %s347 = smul.addr %s346, 8
        %s348 = scalar_lea.vmem %s3, %s347
        %p349 = pneg %p116
        %p350 = pneg %p113
        %p351 = pneg %p142
        %p352 = pneg %p139
        %s353 = sand.u32 %s129, 1
        %s354 = scalar_lea.sflag [#allocation4], %s353
        %s355 = sand.u32 %s129, 1
        %s356 = smul.addr %s355, 72
        %s357 = scalar_lea.vmem [#allocation8], %s356
        %s358 = smul.u32 3, %s22
        %s359 = smul.u32 3, %s22
        %s360 = smul.u32 3, %s22
        %p361 = scmp.lt.s32.totalorder %s360, 5
        %s362 = scalar_select %p361, %s360, 5
        %s363 = smul.addr %s362, 8
        %s364 = scalar_lea.vmem %s3, %s363
        %s365 = smul.u32 3, %s22
        %s366 = smul.u32 3, %s22
        %s367 = sld [smem:[#allocation2]]
        %s368 = sld [smem:[#allocation2 + $0x1]]
        %s369 = sld [smem:[#allocation2 + $0x2]]
        %s370 = sld [smem:[#allocation2 + $0x3]]
        %s371 = sld [smem:[#allocation2 + $0x4]]
        %v372 = vld [vmem:[%s364] sm:$0xff]
        %v373 = vld [vmem:[%s364 + $0x8] sm:$0xff]
        %v374 = vld [vmem:[%s364 + $0x10] sm:$0xff]
        %v375 = vstv %s371
        %v376 = vmul.f32 %v375, %v372
        %v377 = vmul.f32 %v375, %v373
        %v378 = vmul.f32 %v375, %v374
        %v379 = vld [vmem:[%s324] sm:$0xff]
        %v380 = vld [vmem:[%s324 + $0x8] sm:$0xff]
        %v381 = vld [vmem:[%s324 + $0x10] sm:$0xff]
        %v382 = vstv %s367
        %v383 = vmul.f32 %v382, %v379
        %v384 = vmul.f32 %v382, %v380
        %v385 = vmul.f32 %v382, %v381
        %v386 = vstv %s368
        %v387 = vadd.f32 %v383, %v386
        %v388 = vadd.f32 %v384, %v386
        %v389 = vadd.f32 %v385, %v386
        %v390 = vmax.f32 %v387, 0.0
        %v391 = vmax.f32 %v388, 0.0
        %v392 = vmax.f32 %v389, 0.0
        %v393 = vmin.f32 %v390, 1.0
        %v394 = vmin.f32 %v391, 1.0
        %v395 = vmin.f32 %v392, 1.0
        %s396 = scalar_lea.vmem %s324, 24 [#allocation7]
        %v397 = vld [vmem:[%s396] sm:$0xff]
        %v398 = vld [vmem:[%s396 + $0x8] sm:$0xff]
        %v399 = vld [vmem:[%s396 + $0x10] sm:$0xff]
        %v400 = vmul.f32 %v382, %v397
        %v401 = vmul.f32 %v382, %v398
        %v402 = vmul.f32 %v382, %v399
        %v403 = vadd.f32 %v400, %v386
        %v404 = vadd.f32 %v401, %v386
        %v405 = vadd.f32 %v402, %v386
        %v406 = vmax.f32 %v403, 0.0
        %v407 = vmax.f32 %v404, 0.0
        %v408 = vmax.f32 %v405, 0.0
        %v409 = vmin.f32 %v406, 1.0
        %v410 = vmin.f32 %v407, 1.0
        %v411 = vmin.f32 %v408, 1.0
        %s412 = scalar_lea.vmem %s324, 48 [#allocation7]
        %v413 = vld [vmem:[%s412] sm:$0xff]
        %v414 = vld [vmem:[%s412 + $0x8] sm:$0xff]
        %v415 = vld [vmem:[%s412 + $0x10] sm:$0xff]
        %v416 = vmul.f32 %v382, %v413
        %v417 = vmul.f32 %v382, %v414
        %v418 = vmul.f32 %v382, %v415
        %v419 = vadd.f32 %v416, %v386
        %v420 = vadd.f32 %v417, %v386
        %v421 = vadd.f32 %v418, %v386
        %v422 = vmax.f32 %v419, 0.0
        %v423 = vmax.f32 %v420, 0.0
        %v424 = vmax.f32 %v421, 0.0
        %v425 = vmin.f32 %v422, 1.0
        %v426 = vmin.f32 %v423, 1.0
        %v427 = vmin.f32 %v424, 1.0
        %v428 = vmul.f32 %v393, 0.2989
        %v429 = vmul.f32 %v394, 0.2989
        %v430 = vmul.f32 %v395, 0.2989
        %v431 = vmul.f32 %v409, 0.587
        %v432 = vmul.f32 %v410, 0.587
        %v433 = vmul.f32 %v411, 0.587
        %v434 = vadd.f32 %v428, %v431
        %v435 = vadd.f32 %v429, %v432
        %v436 = vadd.f32 %v430, %v433
        %v437 = vmul.f32 %v425, 0.114
        %v438 = vmul.f32 %v426, 0.114
        %v439 = vmul.f32 %v427, 0.114
        %v440 = vadd.f32 %v434, %v437
        %v441 = vadd.f32 %v435, %v438
        %v442 = vadd.f32 %v436, %v439
        %s443 = ssub.f32 1.0, %s369
        %v444 = vstv %s443
        %v445 = vmul.f32 %v444, %v440
        %v446 = vmul.f32 %v444, %v441
        %v447 = vmul.f32 %v444, %v442
        %v448 = vstv %s369
        %v449 = vmul.f32 %v448, %v393
        %v450 = vmul.f32 %v448, %v394
        %v451 = vmul.f32 %v448, %v395
        %v452 = vadd.f32 %v449, %v445
        %v453 = vadd.f32 %v450, %v446
        %v454 = vadd.f32 %v451, %v447
        %v455 = vmax.f32 %v452, 0.0
        %v456 = vmax.f32 %v453, 0.0
        %v457 = vmax.f32 %v454, 0.0
        %v458 = vmin.f32 %v455, 1.0
        %v459 = vmin.f32 %v456, 1.0
        %v460 = vmin.f32 %v457, 1.0
        %v461 = vstv %s370
        %v462 = vmul.f32 %v461, %v458
        %v463 = vmul.f32 %v461, %v459
        %v464 = vmul.f32 %v461, %v460
        %v465 = vmax.f32 %v462, 0.0
        %v466 = vmax.f32 %v463, 0.0
        %v467 = vmax.f32 %v464, 0.0
        %v468 = vmin.f32 %v465, 1.0
        %v469 = vmin.f32 %v466, 1.0
        %v470 = vmin.f32 %v467, 1.0
        %v471 = vld [vmem:[%s316] sm:$0xff]
        %v472 = vld [vmem:[%s316 + $0x8] sm:$0xff]
        %v473 = vld [vmem:[%s316 + $0x10] sm:$0xff]
        %v474 = vsub.f32 %v468, %v471
        %v475 = vsub.f32 %v469, %v472
        %v476 = vsub.f32 %v470, %v473
        %v477 = vmul.f32 %v376, %v474
        %v478 = vmul.f32 %v377, %v475
        %v479 = vmul.f32 %v378, %v476
        %v480 = vadd.f32 %v477, %v471
        %v481 = vadd.f32 %v478, %v472
        %v482 = vadd.f32 %v479, %v473
        %vm483 = vcmask 392192
        %484 = vst.msk [vmem:[%s357] sm:$0xff] %vm483, %v480
        %485 = vst.msk [vmem:[%s357 + $0x8] sm:$0xff] %vm483, %v481
        %486 = vst.msk [vmem:[%s357 + $0x10] sm:$0xff] %vm483, %v482
        %v487 = vmul.f32 %v448, %v409
        %v488 = vmul.f32 %v448, %v410
        %v489 = vmul.f32 %v448, %v411
        %v490 = vadd.f32 %v487, %v445
        %v491 = vadd.f32 %v488, %v446
        %v492 = vadd.f32 %v489, %v447
        %v493 = vmax.f32 %v490, 0.0
        %v494 = vmax.f32 %v491, 0.0
        %v495 = vmax.f32 %v492, 0.0
        %v496 = vmin.f32 %v493, 1.0
        %v497 = vmin.f32 %v494, 1.0
        %v498 = vmin.f32 %v495, 1.0
        %v499 = vmul.f32 %v461, %v496
        %v500 = vmul.f32 %v461, %v497
        %v501 = vmul.f32 %v461, %v498
        %v502 = vmax.f32 %v499, 0.0
        %v503 = vmax.f32 %v500, 0.0
        %v504 = vmax.f32 %v501, 0.0
        %v505 = vmin.f32 %v502, 1.0
        %v506 = vmin.f32 %v503, 1.0
        %v507 = vmin.f32 %v504, 1.0
        %s508 = scalar_lea.vmem %s316, 24 [#allocation6]
        %v509 = vld [vmem:[%s508] sm:$0xff]
        %v510 = vld [vmem:[%s508 + $0x8] sm:$0xff]
        %v511 = vld [vmem:[%s508 + $0x10] sm:$0xff]
        %v512 = vsub.f32 %v505, %v509
        %v513 = vsub.f32 %v506, %v510
        %v514 = vsub.f32 %v507, %v511
        %v515 = vmul.f32 %v376, %v512
        %v516 = vmul.f32 %v377, %v513
        %v517 = vmul.f32 %v378, %v514
        %v518 = vadd.f32 %v515, %v509
        %v519 = vadd.f32 %v516, %v510
        %v520 = vadd.f32 %v517, %v511
        %s521 = scalar_lea.vmem %s357, 24 [#allocation8]
        %522 = vst.msk [vmem:[%s521] sm:$0xff] %vm483, %v518
        %523 = vst.msk [vmem:[%s521 + $0x8] sm:$0xff] %vm483, %v519
        %524 = vst.msk [vmem:[%s521 + $0x10] sm:$0xff] %vm483, %v520
        %v525 = vmul.f32 %v448, %v425
        %v526 = vmul.f32 %v448, %v426
        %v527 = vmul.f32 %v448, %v427
        %v528 = vadd.f32 %v525, %v445
        %v529 = vadd.f32 %v526, %v446
        %v530 = vadd.f32 %v527, %v447
        %v531 = vmax.f32 %v528, 0.0
        %v532 = vmax.f32 %v529, 0.0
        %v533 = vmax.f32 %v530, 0.0
        %v534 = vmin.f32 %v531, 1.0
        %v535 = vmin.f32 %v532, 1.0
        %v536 = vmin.f32 %v533, 1.0
        %v537 = vmul.f32 %v461, %v534
        %v538 = vmul.f32 %v461, %v535
        %v539 = vmul.f32 %v461, %v536
        %v540 = vmax.f32 %v537, 0.0
        %v541 = vmax.f32 %v538, 0.0
        %v542 = vmax.f32 %v539, 0.0
        %v543 = vmin.f32 %v540, 1.0
        %v544 = vmin.f32 %v541, 1.0
        %v545 = vmin.f32 %v542, 1.0
        %s546 = scalar_lea.vmem %s316, 48 [#allocation6]
        %v547 = vld [vmem:[%s546] sm:$0xff]
        %v548 = vld [vmem:[%s546 + $0x8] sm:$0xff]
        %v549 = vld [vmem:[%s546 + $0x10] sm:$0xff]
        %v550 = vsub.f32 %v543, %v547
        %v551 = vsub.f32 %v544, %v548
        %v552 = vsub.f32 %v545, %v549
        %v553 = vmul.f32 %v376, %v550
        %v554 = vmul.f32 %v377, %v551
        %v555 = vmul.f32 %v378, %v552
        %v556 = vadd.f32 %v553, %v547
        %v557 = vadd.f32 %v554, %v548
        %v558 = vadd.f32 %v555, %v549
        %s559 = scalar_lea.vmem %s357, 48 [#allocation8]
        %560 = vst.msk [vmem:[%s559] sm:$0xff] %vm483, %v556
        %561 = vst.msk [vmem:[%s559 + $0x8] sm:$0xff] %vm483, %v557
        %562 = vst.msk [vmem:[%s559 + $0x10] sm:$0xff] %vm483, %v558
        %s563 = sand.u32 %s129, 1
        %s564 = scalar_lea.sflag [#allocation4], %s563
        %s565 = sand.u32 %s129, 1
        %s566 = smul.addr %s565, 72
        %s567 = scalar_lea.vmem [#allocation8], %s566
        // Predicated region
        $region83: #{tpu_custom_call.1} parent=69 // pred_check
          %p568 = pneg %p139
        $region84: #{tpu_custom_call.1} parent=69 // pred_check_branch
          %570 = sbr.rel (%p568) target = $region86
        $region85: #{tpu_custom_call.1} parent=69 // pred_region
          #allocation12 [shape = 'u32[6]{0}', space=smem, size = 0x18, scoped, tag = 'DMA stride descriptor']
          %s571 = smul.u32 3, %s22
          %s573 = ssub.s32 1152, 1152
          %574 = vsyncadd %s564, %s573
          %s575 = smul.addr %s571, 128
          %s576 = scalar_lea.hbm %s4, %s575
          %s578 = sshll.u32 1, 14
          %s579 = sxor.u32 4294967295, %s578
          %s582 = sshll.u32 7, 18
          %s583 = sxor.u32 4294967295, %s582
          %s584 = sand.u32 0, %s583
          %s586 = sor.u32 %s584, 0
          %s588 = sshll.u32 3, 24
          %s589 = sxor.u32 4294967295, %s588
          %s590 = sand.u32 %s586, %s589
          %s592 = sor.u32 %s590, 0
          %s593 = sshll.u32 %s567, 4
          %s594 = int_to_ptr.vmem [resolvable:$true] %s593
          %600 = sst [smem:[#allocation12]] 384
          %s601 = scalar_lea.smem [#allocation12], 1
          %602 = sst [smem:[%s601]] 768
          %s603 = scalar_lea.smem [#allocation12], 2
          %604 = sst [smem:[%s603]] 3
          %s605 = scalar_lea.smem [#allocation12], 3
          %606 = sst [smem:[%s605]] 128
          %s607 = scalar_lea.smem [#allocation12], 4
          %608 = sst [smem:[%s607]] 128
          %s609 = scalar_lea.smem [#allocation12], 5
          %610 = sst [smem:[%s609]] 8
          %612 = dma.general %s594, 1152, %s576, %s564, [#allocation11], [#allocation12], %s592, 0
        $region86: #{tpu_custom_call.1} parent=69 // pred_fallthru
          _
      $region70: #{tpu_custom_call.1} parent=5 // pred_fallthru
        _
      %p613 = scmp.le.s32.totalorder 2, %s17
      // Predicated region
      $region87: #{tpu_custom_call.1} parent=5 // pred_check
        %p614 = pneg %p613
      $region88: #{tpu_custom_call.1} parent=5 // pred_check_branch
        %616 = sbr.rel (%p614) target = $region90
      $region89: #{tpu_custom_call.1} parent=5 // pred_region
        %s617 = ssub.s32 %s17, 2
        // Predicated region
        $region91: #{tpu_custom_call.1} parent=89 // pred_check
          %p618 = pneg %p145
        $region92: #{tpu_custom_call.1} parent=89 // pred_check_branch
          %620 = sbr.rel (%p618) target = $region94
        $region93: #{tpu_custom_call.1} parent=89 // pred_region
          %s621 = sand.u32 %s130, 1
          %s622 = scalar_lea.sflag [#allocation4], %s621
          %s623 = sand.u32 %s130, 1
          %s624 = smul.addr %s623, 72
          %s625 = scalar_lea.vmem [#allocation8], %s624
          %626 = dma.done %s622, 1152
        $region94: #{tpu_custom_call.1} parent=89 // pred_fallthru
          _
      $region90: #{tpu_custom_call.1} parent=5 // pred_fallthru
        _
    $region6: #{tpu_custom_call.1} parent=1 // loop_footer
      %s21 = sadd.s32 1, %s17
    $region7: #{tpu_custom_call.1} parent=1 // loop_footer_branch
      %16 = sbr.rel target = $region3
    $region8: #{tpu_custom_call.1} parent=1 // loop_exit
      _
    %627 = vsyncpa [#allocation3], 1
    %s628 = scalar_lea.sflag [#allocation3], 1
    %629 = vsyncpa %s628, 1
    %630 = vsyncpa [#allocation4], 1
    %s631 = scalar_lea.sflag [#allocation4], 1
    %632 = vsyncpa %s631, 1
    %633 = vsyncpa [#allocation5], 1
    %s634 = scalar_lea.sflag [#allocation5], 1
    %635 = vsyncpa %s634, 1

</llo_original>
